<compile_context>
chip_gen: v6e
topology: v6e:2x2x1
jax: 0.10.0
libtpu: 0.0.40
codegen_flags: <defaults>
</compile_context>

<pallas_src>
import jax
import jax.numpy as jnp
import numpy as np
from jax.experimental import pallas as pl
from jax.experimental.pallas import tpu as pltpu

# LeNet-5 C3 connectivity table: mapInfo[in_channel, out_channel]
MAP_INFO = np.array(
    [[1, 0, 0, 0, 1, 1, 1, 0, 0, 1, 1, 1, 1, 0, 1, 1],
     [1, 1, 0, 0, 0, 1, 1, 1, 0, 0, 1, 1, 1, 1, 0, 1],
     [1, 1, 1, 0, 0, 0, 1, 1, 1, 0, 0, 1, 0, 1, 1, 1],
     [0, 1, 1, 1, 0, 0, 1, 1, 1, 1, 0, 0, 1, 0, 1, 1],
     [0, 0, 1, 1, 1, 0, 0, 1, 1, 1, 1, 0, 1, 1, 0, 1],
     [0, 0, 0, 1, 1, 1, 0, 0, 1, 1, 1, 1, 0, 1, 1, 1]],
    dtype=np.int32)

IN_CHANNEL = 6
OUT_CHANNEL = 16
KERNEL_SIZE = 5


def _round_up(v, m):
    return ((v + m - 1) // m) * m


def _cdiv(a, b):
    return (a + b - 1) // b


def _init_params(key):
    """Deterministic parameter init mimicking per-conv torch Conv2d init,
    scattered into a dense masked weight (O, C, K, K) and bias (O,)."""
    w_full = np.zeros((OUT_CHANNEL, IN_CHANNEL, KERNEL_SIZE, KERNEL_SIZE),
                      dtype=np.float32)
    b_full = np.zeros((OUT_CHANNEL,), dtype=np.float32)
    keys = jax.random.split(key, OUT_CHANNEL * 2)
    for i in range(OUT_CHANNEL):
        sel = np.nonzero(MAP_INFO[:, i])[0]
        n_sel = sel.shape[0]
        fan_in = n_sel * KERNEL_SIZE * KERNEL_SIZE
        bound = 1.0 / np.sqrt(fan_in)
        w_i = jax.random.uniform(keys[2 * i],
                                 (n_sel, KERNEL_SIZE, KERNEL_SIZE),
                                 minval=-bound, maxval=bound,
                                 dtype=jnp.float32)
        b_i = jax.random.uniform(keys[2 * i + 1], (),
                                 minval=-bound, maxval=bound,
                                 dtype=jnp.float32)
        w_full[i, sel, :, :] = np.asarray(w_i)
        b_full[i] = float(b_i)
    return jnp.asarray(w_full), jnp.asarray(b_full)


def mapconv_kernel(w_ref, p_ref, o_ref):
    # w_ref: (O, CKK_pad)   flat weight, bias folded into column CKK (resident)
    # p_ref: (CKK_pad, TP)  im2col patch tile for one image (lane-dense RHS)
    # o_ref: (O, TP)        lane-dense output tile (unmasked 128-multiple vst)
    o_ref[...] = jnp.dot(
        w_ref[...], p_ref[...],
        preferred_element_type=jnp.float32).astype(o_ref.dtype)


def mapconv(x, w, b):
    """x: (N, 6, H, W) float32 -> (N, 16, H-4, W-4) float32."""
    N, C, H, W = x.shape
    O = w.shape[0]
    K = w.shape[2]
    Ho, Wo = H - K + 1, W - K + 1
    P_img = Ho * Wo                 # pixels per image (lane axis)
    CKK = C * K * K                 # contraction (sublane axis)

    # +1 contraction row for the folded bias, then minimal sublane pad (8).
    CKK_pad = _round_up(CKK + 1, 8)

    # Pixel tile selection:
    #  - small images: a single round_up(P_img, 128) block (minimal per-step
    #    overhead, minimal dead padding at 128-lane granularity).
    #  - large images: even block count (splits evenly across v7x TCs),
    #    tiles <= 8192 lanes, tile width chosen to minimize padding.
    if P_img <= 2048:
        n_blk = 1
        TP = _round_up(P_img, 128)
    else:
        n_blk = 2 * _cdiv(P_img, 2 * 8192)
        TP = _round_up(_cdiv(P_img, n_blk), 128)
    P_pad = n_blk * TP

    # Flat weight (O, CKK_pad) with bias folded into column CKK;
    # remaining pad columns stay zero.
    w_aug = jnp.zeros((O, CKK_pad), dtype=w.dtype)
    w_aug = w_aug.at[:, :CKK].set(w.reshape(O, CKK))
    w_aug = w_aug.at[:, CKK].set(b)

    # im2col kept in (N, CKK, Ho*Wo) order: stack + free reshape, no transpose
    # of the expanded slab. Row index c*K*K + kh*K + kw matches
    # w.reshape(O, C*K*K). Extra all-ones row carries the bias; padded pixel
    # columns are zero and get sliced off after the kernel.
    taps = [x[:, :, kh:kh + Ho, kw:kw + Wo]
            for kh in range(K) for kw in range(K)]
    patches = jnp.stack(taps, axis=2)               # (N, C, K*K, Ho, Wo)
    patches = patches.reshape(N, CKK, P_img)        # (N, CKK, Ho*Wo)
    ones = jnp.ones((N, 1, P_img), dtype=x.dtype)   # bias row
    patches = jnp.concatenate([patches, ones], axis=1)
    patches = jnp.pad(patches, ((0, 0),
                                (0, CKK_pad - CKK - 1),
                                (0, P_pad - P_img)))

    out = pl.pallas_call(
        mapconv_kernel,
        out_shape=jax.ShapeDtypeStruct((N, O, P_pad), x.dtype),
        grid_spec=pltpu.PrefetchScalarGridSpec(
            num_scalar_prefetch=0,
            grid=(N, P_pad // TP),
            in_specs=[
                # Weight is resident: same block index every step -> one DMA.
                pl.BlockSpec((O, CKK_pad), lambda n, i: (0, 0)),
                pl.BlockSpec((pl.Squeezed(), CKK_pad, TP),
                             lambda n, i: (n, 0, i)),
            ],
            out_specs=pl.BlockSpec((pl.Squeezed(), O, TP),
                                   lambda n, i: (n, 0, i)),
        ),
        compiler_params=pltpu.CompilerParams(
            dimension_semantics=("parallel", "parallel"),
            vmem_limit_bytes=32 * 1024 * 1024),
    )(w_aug, patches)

    # Straight to NCHW: slice padded pixels, free reshape, no final transpose.
    return out[:, :, :P_img].reshape(N, O, Ho, Wo)


def _reference(x, w, b):
    # Dense masked conv == the original per-group sparse convs.
    out = jax.lax.conv_general_dilated(
        x, w, window_strides=(1, 1), padding="VALID",
        dimension_numbers=("NCHW", "OIHW", "NCHW"))
    return out + b.reshape(1, -1, 1, 1)


if __name__ == "__main__":
    key = jax.random.PRNGKey(0)
    k_param, k_x = jax.random.split(key)
    w, b = _init_params(k_param)

    N, C, H, W = 2, IN_CHANNEL, 16, 16
    x = jax.random.normal(k_x, (N, C, H, W), dtype=jnp.float32)

    out = jax.block_until_ready(mapconv(x, w, b))

    ref = _reference(x, w, b)
    np.testing.assert_allclose(np.asarray(out), np.asarray(ref),
                               rtol=1e-5, atol=1e-5)
    print("KERNEL_OK")
</pallas_src>

<mosaic_0001>
module attributes {stable_mosaic.version = 11 : i64} {
  func.func @mapconv_kernel(%arg0: i32, %arg1: i32, %arg2: memref<16x152xf32, #tpu.memory_space<vmem>>, %arg3: memref<1x152x256xf32, #tpu.memory_space<vmem>>, %arg4: memref<1x16x256xf32, #tpu.memory_space<vmem>>) attributes {dimension_semantics = [#tpu.dimension_semantics<parallel>, #tpu.dimension_semantics<parallel>], iteration_bounds = array<i64: 2, 1>, scalar_prefetch = 0 : i64, scratch_operands = 0 : i64, tpu.core_type = #tpu.core_type<tc>, window_params = [{pipeline_mode = #tpu.pipeline_mode<synchronous>, transform_indices = @transform_0, window_bounds = array<i64: 16, 152>}, {transform_indices = @transform_1, window_bounds = array<i64: 1, 152, 256>}, {transform_indices = @transform_2, window_bounds = array<i64: 1, 16, 256>}]} {
    %c0 = arith.constant 0 : index
    %c0_0 = arith.constant 0 : index
    %0 = vector.load %arg2[%c0, %c0_0] : memref<16x152xf32, #tpu.memory_space<vmem>>, vector<16x152xf32>
    %c0_1 = arith.constant 0 : index
    %c0_2 = arith.constant 0 : index
    %c0_3 = arith.constant 0 : index
    %1 = vector.load %arg3[%c0_1, %c0_2, %c0_3] : memref<1x152x256xf32, #tpu.memory_space<vmem>>, vector<1x152x256xf32>
    %2 = vector.shape_cast %1 : vector<1x152x256xf32> to vector<152x256xf32>
    %cst = arith.constant dense<0.000000e+00> : vector<16x256xf32>
    %3 = tpu.matmul %0, %2, %cst {dimension_numbers = #tpu.dot_dimension_numbers<[1], [0], [0], [1], [0, 0, 1, 1], [], []>} : vector<16x152xf32>, vector<152x256xf32>, vector<16x256xf32> -> vector<16x256xf32>
    %c0_4 = arith.constant 0 : index
    %c0_5 = arith.constant 0 : index
    %c0_6 = arith.constant 0 : index
    %4 = vector.load %arg4[%c0_4, %c0_5, %c0_6] : memref<1x16x256xf32, #tpu.memory_space<vmem>>, vector<1x16x256xf32>
    %5 = vector.shape_cast %4 : vector<1x16x256xf32> to vector<16x256xf32>
    %6 = vector.shape_cast %3 : vector<16x256xf32> to vector<1x16x256xf32>
    tpu.vector_store %arg4[%c0_4, %c0_5, %c0_6], %6 {strides = array<i32>} : memref<1x16x256xf32, #tpu.memory_space<vmem>>, vector<1x16x256xf32>,
    return
  }
  func.func @transform_0(%arg0: i32, %arg1: i32) -> (i32, i32) {
    %c0_i32 = arith.constant 0 : i32
    %c0_i32_0 = arith.constant 0 : i32
    %c0_i32_1 = arith.constant 0 : i32
    return %c0_i32, %c0_i32_0 : i32, i32
  }
  func.func @transform_1(%arg0: i32, %arg1: i32) -> (i32, i32, i32) {
    %c0_i32 = arith.constant 0 : i32
    %c0_i32_0 = arith.constant 0 : i32
    return %arg0, %c0_i32, %arg1 : i32, i32, i32
  }
  func.func @transform_2(%arg0: i32, %arg1: i32) -> (i32, i32, i32) {
    %c0_i32 = arith.constant 0 : i32
    %c0_i32_0 = arith.constant 0 : i32
    return %arg0, %c0_i32, %arg1 : i32, i32, i32
  }
}

</mosaic_0001>

<llo_original>
// kernel: tpu_custom_call.1
$region0: #{tpu_custom_call.1}
  #allocation0 [shape = 'u32[]', space=smem, size = 0x4, offset = 0x4, fixed_abs, tag = 'smem constant byte address 0x4 - core index']
  #allocation1 [shape = 'u32[144,128]{1,0:T(1,128)}', space=vmem, size = 0x12000, scoped, tag = 'internal scratch']
  %s0 = inlined_call_operand.hbm [shape: f32[16,152], index: 0, kind: input, shape index: {}]
  %s1 = inlined_call_operand.hbm [shape: f32[2,152,256], index: 1, kind: input, shape index: {}]
  %s2 = inlined_call_operand.hbm [shape: f32[2,16,256], index: 2, kind: output, shape index: {}]
  %s3 = sld [smem:[#allocation0]]
  $region49: #{tpu_custom_call.1} parent=0
    _
  %s5 = ssub.s32 1, %s3
  %s6 = scalar_select 0, %s5, %s3
  $region1: #{tpu_custom_call.1} parent=0
    #allocation2 [shape = 'u8[16384]{0}', space=vmem, size = 0x4000, scoped, tag = 'input window, operand 0, single buffered']
    #allocation3 [shape = 's32[2]{0}', space=sflag, size = 0x8, scoped, tag = 'scoped memory for tpu_custom_call.1']
    #allocation4 [shape = 's32[2]{0}', space=sflag, size = 0x8, scoped, tag = 'scoped memory for tpu_custom_call.1']
    #allocation5 [shape = 'u8[311296]{0}', space=vmem, size = 0x4c000, scoped, tag = 'input window, operand 1']
    #allocation6 [shape = 's32[2]{0}', space=sflag, size = 0x8, scoped, tag = 'scoped memory for tpu_custom_call.1']
    #allocation7 [shape = 'u8[32768]{0}', space=vmem, size = 0x8000, scoped, tag = 'output window, operand 0']
    %7 = vsyncpa [#allocation3], 0
    %8 = vsyncpa [#allocation6], 0
    %s9 = scalar_lea.sflag [#allocation6], 1
    %10 = vsyncpa %s9, 0
    %11 = vsyncpa [#allocation4], 0
    %s12 = scalar_lea.sflag [#allocation4], 1
    %13 = vsyncpa %s12, 0
    loop: start=0, step=1, limit=4
    $region2: #{tpu_custom_call.1} parent=1 // loop_pre_header
      _
    $region3: #{tpu_custom_call.1} parent=1 // loop_header
      %s15 = sphi 0, %s19
      %p16 = scmp.ge.s32.totalorder %s15, 4
      %s22 = sphi 0, %s34
      %s23 = sphi 0, %s30
      %s24 = sphi 0, %s22
      %s25 = sphi 0, %s23
      %s26 = sphi 0, %s24
      %s27 = sphi 0, %s25
      %s35 = sphi 0, %s35
      %s37 = sphi 0, %s35
      %s38 = sphi 0, %s37
      %s52 = sphi 0, %s38
      %s60 = sphi 0, %s62
      %s63 = sphi 0, %s60
      %s64 = sphi 0, %s63
      %s80 = sphi 0, %s64
      %s88 = sphi 0, %s90
      %s91 = sphi 0, %s88
      %s92 = sphi 0, %s91
      %s108 = sphi 0, %s92
    $region4: #{tpu_custom_call.1} parent=1 // loop_header_branch
      %18 = sbr.rel (%p16) target = $region8
    $region5: #{tpu_custom_call.1} parent=1 // loop_body
      %s20 = ssub.s32 %s15, 1
      %s21 = ssub.s32 %s15, 2
      %s28 = sadd.s32 1, %s23
      %p29 = scmp.ge.s32.totalorder %s28, 1
      %s30 = scalar_select %p29, 0, %s28
      %s31 = sadd.s32 1, %s22
      %s32 = scalar_select %p29, %s31, %s22
      %p33 = scmp.ge.s32.totalorder %s32, 2
      %s34 = scalar_select %p33, 0, %s32
      %s36 = sadd.s32 %s35, 1
      %p39 = scmp.eq.s32.totalorder %s15, 1
      %p40 = scmp.ne.s32.totalorder %s35, %s37
      %p41 = scmp.eq.s32.totalorder %s15, 0
      %p42 = por %p40, %p41
      %p43 = scmp.ne.s32.totalorder %s35, %s37
      %p44 = scmp.eq.s32.totalorder %s20, 1
      %p45 = por %p43, %p44
      %p46 = scmp.ne.s32.totalorder %s37, %s38
      %p47 = scmp.eq.s32.totalorder %s20, 0
      %p48 = por %p46, %p47
      %p49 = scmp.ne.s32.totalorder %s37, %s38
      %p50 = scmp.eq.s32.totalorder %s21, 1
      %p51 = por %p49, %p50
      %p53 = scmp.ne.s32.totalorder %s38, %s52
      %p54 = scmp.eq.s32.totalorder %s21, 0
      %p55 = por %p53, %p54
      %s56 = ssub.s32 %s22, %s34
      %s57 = ssub.s32 %s23, %s30
      %s58 = sor.u32 %s56, %s57
      %p59 = scmp.eq.s32.totalorder %s58, 0
      %s61 = sadd.s32 %s60, 1
      %s62 = scalar_select %p59, %s60, %s61
      %p65 = pneg %p59
      %p66 = scmp.eq.s32.totalorder %s15, 1
      %p67 = por %p65, %p66
      %p68 = scmp.ne.s32.totalorder %s60, %s63
      %p69 = scmp.eq.s32.totalorder %s15, 0
      %p70 = por %p68, %p69
      %p71 = scmp.ne.s32.totalorder %s60, %s63
      %p72 = scmp.eq.s32.totalorder %s20, 1
      %p73 = por %p71, %p72
      %p74 = scmp.ne.s32.totalorder %s63, %s64
      %p75 = scmp.eq.s32.totalorder %s20, 0
      %p76 = por %p74, %p75
      %p77 = scmp.ne.s32.totalorder %s63, %s64
      %p78 = scmp.eq.s32.totalorder %s21, 1
      %p79 = por %p77, %p78
      %p81 = scmp.ne.s32.totalorder %s64, %s80
      %p82 = scmp.eq.s32.totalorder %s21, 0
      %p83 = por %p81, %p82
      %s84 = ssub.s32 %s22, %s34
      %s85 = ssub.s32 %s23, %s30
      %s86 = sor.u32 %s84, %s85
      %p87 = scmp.eq.s32.totalorder %s86, 0
      %s89 = sadd.s32 %s88, 1
      %s90 = scalar_select %p87, %s88, %s89
      %p93 = pneg %p87
      %p94 = scmp.eq.s32.totalorder %s15, 1
      %p95 = por %p93, %p94
      %p96 = scmp.ne.s32.totalorder %s88, %s91
      %p97 = scmp.eq.s32.totalorder %s15, 0
      %p98 = por %p96, %p97
      %p99 = scmp.ne.s32.totalorder %s88, %s91
      %p100 = scmp.eq.s32.totalorder %s20, 1
      %p101 = por %p99, %p100
      %p102 = scmp.ne.s32.totalorder %s91, %s92
      %p103 = scmp.eq.s32.totalorder %s20, 0
      %p104 = por %p102, %p103
      %p105 = scmp.ne.s32.totalorder %s91, %s92
      %p106 = scmp.eq.s32.totalorder %s21, 1
      %p107 = por %p105, %p106
      %p109 = scmp.ne.s32.totalorder %s92, %s108
      %p110 = scmp.eq.s32.totalorder %s21, 0
      %p111 = por %p109, %p110
      %p112 = scmp.le.s32.totalorder 1, %s15
      %p113 = scmp.lt.s32.totalorder %s15, 3
      %p114 = pnand %p112, %p113
      %p115 = pneg %p114
      // Predicated region
      $region9: #{tpu_custom_call.1} parent=5 // pred_check
        _
      $region10: #{tpu_custom_call.1} parent=5 // pred_check_branch
        %117 = sbr.rel (%p114) target = $region12
      $region11: #{tpu_custom_call.1} parent=5 // pred_region
        %s118 = ssub.s32 %s15, 1
        // Predicated region
        $region13: #{tpu_custom_call.1} parent=11 // pred_check
          %p119 = pneg %p48
        $region14: #{tpu_custom_call.1} parent=11 // pred_check_branch
          %121 = sbr.rel (%p119) target = $region16
        $region15: #{tpu_custom_call.1} parent=11 // pred_region
          %s123 = ssub.s32 512, 512
          %124 = vsyncadd [#allocation3], %s123
          %s125 = sshll.u32 [#allocation2], 4
          %s126 = int_to_ptr.vmem [resolvable:$true] %s125
          %131 = dma.hbm_to_vmem [thread:$0]  %s0, 512, %s126, [#allocation3], 256, 256, 16
        $region16: #{tpu_custom_call.1} parent=11 // pred_fallthru
          _
      $region12: #{tpu_custom_call.1} parent=5 // pred_fallthru
        _
      %p132 = scmp.lt.s32.totalorder %s15, 2
      // Predicated region
      $region17: #{tpu_custom_call.1} parent=5 // pred_check
        %p133 = pneg %p132
      $region18: #{tpu_custom_call.1} parent=5 // pred_check_branch
        %135 = sbr.rel (%p133) target = $region20
      $region19: #{tpu_custom_call.1} parent=5 // pred_region
        // Predicated region
        $region21: #{tpu_custom_call.1} parent=19 // pred_check
          %p136 = pneg %p70
        $region22: #{tpu_custom_call.1} parent=19 // pred_check_branch
          %138 = sbr.rel (%p136) target = $region24
        $region23: #{tpu_custom_call.1} parent=19 // pred_region
          %s139 = sand.u32 %s60, 1
          %s140 = scalar_lea.sflag [#allocation6], %s139
          %s141 = sand.u32 %s60, 1
          %s142 = smul.addr %s141, 304
          %s143 = scalar_lea.vmem [#allocation5], %s142
          %s144 = smul.u32 2, %s23
          %s146 = ssub.s32 4864, 4864
          %147 = vsyncadd %s140, %s146
          %s148 = smul.addr %s22, 38
          %s149 = sadd.s32 %s144, %s148
          %s150 = smul.addr %s149, 128
          %s151 = scalar_lea.hbm %s1, %s150
          %s152 = sshll.u32 %s143, 4
          %s153 = int_to_ptr.vmem [resolvable:$true] %s152
          %158 = dma.hbm_to_vmem [thread:$0]  %s151, 4864, %s153, %s140, 256, 256, 16
        $region24: #{tpu_custom_call.1} parent=19 // pred_fallthru
          _
      $region20: #{tpu_custom_call.1} parent=5 // pred_fallthru
        _
      %p159 = scmp.le.s32.totalorder 1, %s15
      %p160 = scmp.lt.s32.totalorder %s15, 3
      %p161 = pnand %p159, %p160
      %p162 = pneg %p161
      // Predicated region
      $region25: #{tpu_custom_call.1} parent=5 // pred_check
        _
      $region26: #{tpu_custom_call.1} parent=5 // pred_check_branch
        %164 = sbr.rel (%p161) target = $region28
      $region27: #{tpu_custom_call.1} parent=5 // pred_region
        %s165 = ssub.s32 %s15, 1
        // Predicated region
        $region29: #{tpu_custom_call.1} parent=27 // pred_check
          %p166 = pneg %p48
        $region30: #{tpu_custom_call.1} parent=27 // pred_check_branch
          %168 = sbr.rel (%p166) target = $region32
        $region31: #{tpu_custom_call.1} parent=27 // pred_region
          %169 = dma.done [#allocation3], 512
        $region32: #{tpu_custom_call.1} parent=27 // pred_fallthru
          _
        %s170 = sand.u32 %s63, 1
        %s171 = scalar_lea.sflag [#allocation6], %s170
        %s172 = sand.u32 %s63, 1
        %s173 = smul.addr %s172, 304
        %s174 = scalar_lea.vmem [#allocation5], %s173
        // Predicated region
        $region33: #{tpu_custom_call.1} parent=27 // pred_check
          %p175 = pneg %p76
        $region34: #{tpu_custom_call.1} parent=27 // pred_check_branch
          %177 = sbr.rel (%p175) target = $region36
        $region35: #{tpu_custom_call.1} parent=27 // pred_region
          %178 = dma.done %s171, 4864
        $region36: #{tpu_custom_call.1} parent=27 // pred_fallthru
          _
        %p179 = pneg %p48
        %p180 = pneg %p45
        %s181 = sand.u32 %s63, 1
        %s182 = scalar_lea.sflag [#allocation6], %s181
        %s183 = sand.u32 %s63, 1
        %s184 = smul.addr %s183, 304
        %s185 = scalar_lea.vmem [#allocation5], %s184
        %p186 = pneg %p76
        %p187 = pneg %p73
        %p188 = pneg %p104
        %p189 = pneg %p101
        %s190 = sand.u32 %s91, 1
        %s191 = scalar_lea.sflag [#allocation4], %s190
        %s192 = sand.u32 %s91, 1
        %s193 = smul.addr %s192, 32
        %s194 = scalar_lea.vmem [#allocation7], %s193
        %s195 = smul.u32 2, %s25
        %s196 = smul.u32 2, %s25
        %v197 = vld [vmem:[#allocation2] sm:$0xff]
        %v198 = vld [vmem:[#allocation2 + $0x8] sm:$0xff]
        %v199 = vld [vmem:[#allocation2 + $0x10] sm:$0xff]
        %v200 = vld [vmem:[#allocation2 + $0x18] sm:$0xff]
        %v201 = vld [vmem:[%s174] sm:$0xff]
        %v202 = vld [vmem:[%s174 + $0x8] sm:$0xff]
        %v203 = vld [vmem:[%s174 + $0x10] sm:$0xff]
        %v204 = vld [vmem:[%s174 + $0x18] sm:$0xff]
        %v205 = vld [vmem:[%s174 + $0x20] sm:$0xff]
        %v206 = vld [vmem:[%s174 + $0x28] sm:$0xff]
        %v207 = vld [vmem:[%s174 + $0x30] sm:$0xff]
        %v208 = vld [vmem:[%s174 + $0x38] sm:$0xff]
        %v209 = vld [vmem:[%s174 + $0x40] sm:$0xff]
        %v210 = vld [vmem:[%s174 + $0x48] sm:$0xff]
        %v211 = vld [vmem:[%s174 + $0x50] sm:$0xff]
        %v212 = vld [vmem:[%s174 + $0x58] sm:$0xff]
        %v213 = vld [vmem:[%s174 + $0x60] sm:$0xff]
        %v214 = vld [vmem:[%s174 + $0x68] sm:$0xff]
        %v215 = vld [vmem:[%s174 + $0x70] sm:$0xff]
        %v216 = vld [vmem:[%s174 + $0x78] sm:$0xff]
        %v217 = vld [vmem:[%s174 + $0x80] sm:$0xff]
        %v218 = vld [vmem:[%s174 + $0x88] sm:$0xff]
        %v219 = vld [vmem:[%s174 + $0x90] sm:$0xff]
        %v220 = vld [vmem:[%s174 + $0x98] sm:$0xff]
        %v221 = vld [vmem:[%s174 + $0xa0] sm:$0xff]
        %v222 = vld [vmem:[%s174 + $0xa8] sm:$0xff]
        %v223 = vld [vmem:[%s174 + $0xb0] sm:$0xff]
        %v224 = vld [vmem:[%s174 + $0xb8] sm:$0xff]
        %v225 = vld [vmem:[%s174 + $0xc0] sm:$0xff]
        %v226 = vld [vmem:[%s174 + $0xc8] sm:$0xff]
        %v227 = vld [vmem:[%s174 + $0xd0] sm:$0xff]
        %v228 = vld [vmem:[%s174 + $0xd8] sm:$0xff]
        %v229 = vld [vmem:[%s174 + $0xe0] sm:$0xff]
        %v230 = vld [vmem:[%s174 + $0xe8] sm:$0xff]
        %v231 = vld [vmem:[%s174 + $0xf0] sm:$0xff]
        %v232 = vld [vmem:[%s174 + $0xf8] sm:$0xff]
        %v233 = vld [vmem:[%s174 + $0x100] sm:$0xff]
        %v234 = vld [vmem:[%s174 + $0x108] sm:$0xff]
        %v235 = vld [vmem:[%s174 + $0x110] sm:$0xff]
        %v236 = vld [vmem:[%s174 + $0x118] sm:$0xff]
        %v237 = vld [vmem:[%s174 + $0x120] sm:$0xff]
        %v238 = vld [vmem:[%s174 + $0x128] sm:$0xff]
        %vm239 = vcmask 195584
        %v241 = vsel %vm239, %v198, 0
        %v244 = vsel %vm239, %v200, 0
        %246 = vmatprep.subr.mxu0 %v232
        %247 = vmatpush1.msra.mxu0 %v231
        %248 = vmatprep.subr.mxu0 %v230
        %249 = vmatpush1.msra.mxu0 %v229
        %250 = vmatprep.subr.mxu0 %v228
        %251 = vmatpush1.msra.mxu0 %v227
        %252 = vmatprep.subr.mxu0 %v226
        %253 = vmatpush1.msra.mxu0 %v225
        %254 = vmatprep.subr.mxu0 %v224
        %255 = vmatpush1.msra.mxu0 %v223
        %256 = vmatprep.subr.mxu0 %v222
        %257 = vmatpush1.msra.mxu0 %v221
        %258 = vmatprep.subr.mxu0 %v220
        %259 = vmatpush1.msra.mxu0 %v219
        %260 = vmatprep.subr.mxu0 %v218
        %261 = vmatpush1.msra.mxu0 %v217
        %262 = vmatprep.subr.mxu0 %v216
        %263 = vmatpush1.msra.mxu0 %v215
        %264 = vmatprep.subr.mxu0 %v214
        %265 = vmatpush1.msra.mxu0 %v213
        %266 = vmatprep.subr.mxu0 %v212
        %267 = vmatpush1.msra.mxu0 %v211
        %268 = vmatprep.subr.mxu0 %v210
        %269 = vmatpush1.msra.mxu0 %v209
        %270 = vmatprep.subr.mxu0 %v208
        %271 = vmatpush1.msra.mxu0 %v207
        %272 = vmatprep.subr.mxu0 %v206
        %273 = vmatpush1.msra.mxu0 %v205
        %274 = vmatprep.subr.mxu0 %v204
        %275 = vmatpush1.msra.mxu0 %v203
        %276 = vmatprep.subr.mxu0 %v202
        %277 = vmatpush1.msra.mxu0 %v201
        %278 = vmatprep.subr.mxu0 0.0
        %279 = vmatpush2.msra.mxu0 0.0
        %280 = vmatprep.subr.mxu0 0.0
        %281 = vmatpush2.msra.mxu0 0.0
        %282 = vmatprep.subr.mxu0 0.0
        %283 = vmatpush2.msra.mxu0 0.0
        %284 = vmatprep.subr.mxu0 0.0
        %285 = vmatpush2.msra.mxu0 0.0
        %286 = vmatprep.subr.mxu0 0.0
        %287 = vmatpush2.msra.mxu0 0.0
        %288 = vmatprep.subr.mxu0 0.0
        %289 = vmatpush2.msra.mxu0 0.0
        %290 = vmatprep.subr.mxu0 0.0
        %291 = vmatpush2.msra.mxu0 0.0
        %292 = vmatprep.subr.mxu0 0.0
        %293 = vmatpush2.msra.mxu0 0.0
        %294 = vmatprep.subr.mxu0 0.0
        %295 = vmatpush2.msra.mxu0 0.0
        %296 = vmatprep.subr.mxu0 0.0
        %297 = vmatpush2.msra.mxu0 0.0
        %298 = vmatprep.subr.mxu0 0.0
        %299 = vmatpush2.msra.mxu0 0.0
        %300 = vmatprep.subr.mxu0 0.0
        %301 = vmatpush2.msra.mxu0 0.0
        %302 = vmatprep.subr.mxu0 0.0
        %303 = vmatpush2.msra.mxu0 0.0
        %304 = vmatprep.subr.mxu0 %v238
        %305 = vmatpush2.msra.mxu0 %v237
        %306 = vmatprep.subr.mxu0 %v236
        %307 = vmatpush2.msra.mxu0 %v235
        %308 = vmatprep.subr.mxu0 %v234
        %309 = vmatpush2.msra.mxu0 %v233
        %310 = vmatprep.mubr.f32.mxu0 %v241
        %311 = vmatmul.mubr.f32.gmra.mxu0 %v197
        %v312 = vpop.f32.mrf.mxu0
        %v313 = vadd.f32 0.0, %v312
        %v314 = vpop.f32.mrf.mxu0
        %v315 = vadd.f32 0.0, %v314
        %316 = vmatprep.mubr.f32.mxu0 %v244
        %317 = vmatmul.mubr.f32.gmra.mxu0 %v199
        %v318 = vpop.f32.mrf.mxu0
        %v319 = vadd.f32 0.0, %v318
        %v320 = vpop.f32.mrf.mxu0
        %v321 = vadd.f32 0.0, %v320
        %322 = vdwg.mxu0
        %323 = vst [vmem:[%s194] sm:$0xff] %v313
        %324 = vst [vmem:[%s194 + $0x8] sm:$0xff] %v315
        %325 = vst [vmem:[%s194 + $0x10] sm:$0xff] %v319
        %326 = vst [vmem:[%s194 + $0x18] sm:$0xff] %v321
        %s327 = sand.u32 %s91, 1
        %s328 = scalar_lea.sflag [#allocation4], %s327
        %s329 = sand.u32 %s91, 1
        %s330 = smul.addr %s329, 32
        %s331 = scalar_lea.vmem [#allocation7], %s330
        // Predicated region
        $region37: #{tpu_custom_call.1} parent=27 // pred_check
          %p332 = pneg %p101
        $region38: #{tpu_custom_call.1} parent=27 // pred_check_branch
          %334 = sbr.rel (%p332) target = $region40
        $region39: #{tpu_custom_call.1} parent=27 // pred_region
          %s335 = smul.u32 2, %s25
          %s337 = ssub.s32 512, 512
          %338 = vsyncadd %s328, %s337
          %s339 = smul.addr %s24, 4
          %s340 = sadd.s32 %s335, %s339
          %s341 = smul.addr %s340, 128
          %s342 = scalar_lea.hbm %s2, %s341
          %s343 = sshll.u32 %s331, 4
          %s344 = int_to_ptr.vmem [resolvable:$true] %s343
          %349 = dma.vmem_to_hbm [thread:$0]  %s344, 512, %s342, %s328, 256, 256, 16
        $region40: #{tpu_custom_call.1} parent=27 // pred_fallthru
          _
      $region28: #{tpu_custom_call.1} parent=5 // pred_fallthru
        _
      %p350 = scmp.le.s32.totalorder 2, %s15
      // Predicated region
      $region41: #{tpu_custom_call.1} parent=5 // pred_check
        %p351 = pneg %p350
      $region42: #{tpu_custom_call.1} parent=5 // pred_check_branch
        %353 = sbr.rel (%p351) target = $region44
      $region43: #{tpu_custom_call.1} parent=5 // pred_region
        %s354 = ssub.s32 %s15, 2
        // Predicated region
        $region45: #{tpu_custom_call.1} parent=43 // pred_check
          %p355 = pneg %p107
        $region46: #{tpu_custom_call.1} parent=43 // pred_check_branch
          %357 = sbr.rel (%p355) target = $region48
        $region47: #{tpu_custom_call.1} parent=43 // pred_region
          %s358 = sand.u32 %s92, 1
          %s359 = scalar_lea.sflag [#allocation4], %s358
          %s360 = sand.u32 %s92, 1
          %s361 = smul.addr %s360, 32
          %s362 = scalar_lea.vmem [#allocation7], %s361
          %363 = dma.done %s359, 512
        $region48: #{tpu_custom_call.1} parent=43 // pred_fallthru
          _
      $region44: #{tpu_custom_call.1} parent=5 // pred_fallthru
        _
    $region6: #{tpu_custom_call.1} parent=1 // loop_footer
      %s19 = sadd.s32 1, %s15
    $region7: #{tpu_custom_call.1} parent=1 // loop_footer_branch
      %14 = sbr.rel target = $region3
    $region8: #{tpu_custom_call.1} parent=1 // loop_exit
      _
    %364 = vsyncpa [#allocation3], 1
    %s365 = scalar_lea.sflag [#allocation3], 1
    %366 = vsyncpa %s365, 1
    %367 = vsyncpa [#allocation6], 1
    %s368 = scalar_lea.sflag [#allocation6], 1
    %369 = vsyncpa %s368, 1
    %370 = vsyncpa [#allocation4], 1
    %s371 = scalar_lea.sflag [#allocation4], 1
    %372 = vsyncpa %s371, 1

</llo_original>
